<compile_context>
chip_gen: v7x
topology: tpu7x:2x2x1
jax: 0.10.0
libtpu: 0.0.40
codegen_flags: <defaults>
</compile_context>

<pallas_src>
import functools

import jax
import jax.numpy as jnp
from jax.experimental import pallas as pl
from jax.experimental.pallas import tpu as pltpu

# Logical layer sizes of the MLP (torch module).
DIMS = [282, 188, 94, 47, 13, 7, 1]

# Lane-aligned padded layer widths. The input feature dim (282) is left
# unpadded (it is only the K dim of the first matmul; padding it would inflate
# HBM traffic for x). All hidden widths are zero-padded up to 128 multiples;
# the final out dim stays 1 to keep output traffic minimal.
PAD_OUT = [256, 128, 128, 128, 128, 1]
PAD_IN = [282] + PAD_OUT[:-1]

_ACTS = (jax.nn.relu, jax.nn.sigmoid, jax.nn.sigmoid,
         jax.nn.sigmoid, jax.nn.sigmoid, jax.nn.relu)


def _round_up(n, m):
    return ((n + m - 1) // m) * m


def _mlp_kernel(x_ref,
                w1, b1, w2, b2, w3, b3, w4, b4, w5, b5, w6, b6,
                o_ref):
    """Whole MLP forward for one batch tile.

    Matmuls take bf16 operands with f32 accumulation (MXU); bias add and
    activations are done in f32, then re-cast to bf16 for the next layer.
    """
    def layer(h, w_ref, b_ref, act, *, last=False):
        y = jnp.dot(h, w_ref[...], preferred_element_type=jnp.float32)
        y = act(y + b_ref[...])
        return y if last else y.astype(jnp.bfloat16)

    h = layer(x_ref[...], w1, b1, jax.nn.relu)        # (tb, 256)
    h = layer(h, w2, b2, jax.nn.sigmoid)              # (tb, 128)
    h = layer(h, w3, b3, jax.nn.sigmoid)              # (tb, 128)
    h = layer(h, w4, b4, jax.nn.sigmoid)              # (tb, 128)
    h = layer(h, w5, b5, jax.nn.sigmoid)              # (tb, 128)
    h = layer(h, w6, b6, jax.nn.relu, last=True)      # (tb, 1), f32
    o_ref[...] = h.astype(o_ref.dtype)


def _prepare_params(params):
    """Zero-pad weights/biases to lane-aligned shapes; weights cast to bf16."""
    prepared = []
    for li, (w, b) in enumerate(params):
        fi, fo = w.shape
        in_p, out_p = PAD_IN[li], PAD_OUT[li]
        w_p = jnp.zeros((in_p, out_p), jnp.float32).at[:fi, :fo].set(w)
        b_p = jnp.zeros((1, out_p), jnp.float32).at[:, :fo].set(b)
        prepared.append((w_p.astype(jnp.bfloat16), b_p))
    return prepared


@functools.partial(jax.jit, static_argnames=("batch_tile",))
def mlp_forward(x, params, *, batch_tile=512):
    """x: (B, 282) float32. params: list of (W (in,out) f32, b (1,out) f32)."""
    B, d_in = x.shape
    assert d_in == DIMS[0]

    # MXU-friendly tile, shrunk (to a multiple of 8) for small batches.
    tb = min(batch_tile, max(_round_up(B, 8), 8))
    bp = _round_up(B, tb)
    if bp != B:
        x = jnp.pad(x, ((0, bp - B), (0, 0)))
    x = x.astype(jnp.bfloat16)

    prepared = _prepare_params(params)

    in_specs = [pl.BlockSpec((tb, DIMS[0]), lambda i: (i, 0))]
    flat_params = []
    for w, b in prepared:
        # Full-array constant blocks (small; default double-buffering is fine.
        # If VMEM ever gets tight, pipeline_mode=pl.Buffered(1) would halve it).
        in_specs.append(pl.BlockSpec(w.shape, lambda i: (0, 0)))
        in_specs.append(pl.BlockSpec(b.shape, lambda i: (0, 0)))
        flat_params += [w, b]

    out = pl.pallas_call(
        _mlp_kernel,
        out_shape=jax.ShapeDtypeStruct((bp, DIMS[-1]), jnp.float32),
        grid_spec=pltpu.PrefetchScalarGridSpec(
            num_scalar_prefetch=0,
            grid=(bp // tb,),
            in_specs=in_specs,
            out_specs=pl.BlockSpec((tb, DIMS[-1]), lambda i: (i, 0)),
        ),
        compiler_params=pltpu.CompilerParams(
            dimension_semantics=("parallel",)),
    )(x, *flat_params)
    return out[:B]


def init_params(key):
    """Deterministic init mirroring torch.nn.Linear default U[-1/sqrt(fan_in), +]."""
    params = []
    for i in range(len(DIMS) - 1):
        fan_in, fan_out = DIMS[i], DIMS[i + 1]
        key, kw, kb = jax.random.split(key, 3)
        bound = 1.0 / jnp.sqrt(jnp.float32(fan_in))
        # Stored already transposed: (in, out) so forward is x @ W + b.
        w_t = jax.random.uniform(kw, (fan_in, fan_out), jnp.float32,
                                 minval=-bound, maxval=bound)
        b = jax.random.uniform(kb, (1, fan_out), jnp.float32,
                               minval=-bound, maxval=bound)
        params.append((w_t, b))
    return params


def reference_forward_f32(x, params):
    """Pure-JAX f32 reference of the module forward."""
    h = x
    for (w, b), act in zip(params, _ACTS):
        h = act(h @ w + b)
    return h


def reference_forward_bf16(x, params):
    """Pure-JAX reference mirroring the kernel's bf16-matmul / f32-accum math."""
    h = x.astype(jnp.bfloat16)
    n = len(params)
    for i, ((w, b), act) in enumerate(zip(params, _ACTS)):
        y = jnp.dot(h, w.astype(jnp.bfloat16),
                    preferred_element_type=jnp.float32) + b
        h = act(y)
        if i < n - 1:
            h = h.astype(jnp.bfloat16)
    return h


if __name__ == "__main__":
    key = jax.random.PRNGKey(0)
    k_params, k_x = jax.random.split(key)

    params = init_params(k_params)

    B = 13  # deliberately not a multiple of 8 to exercise ragged-batch padding
    x = jax.random.normal(k_x, (B, DIMS[0]), jnp.float32)

    out = mlp_forward(x, params)
    out = jax.block_until_ready(out)
    assert out.shape == (B, 1)

    # Bit-for-bit-ish check against a reference using the same bf16 matmul math.
    ref16 = reference_forward_bf16(x, params)
    assert jnp.allclose(out, ref16, atol=2e-3, rtol=2e-3), "mismatch vs bf16 reference"

    # Semantic check against the full-f32 reference (looser: bf16 matmul inputs).
    ref32 = reference_forward_f32(x, params)
    assert jnp.allclose(out, ref32, atol=5e-2, rtol=5e-2), "mismatch vs f32 reference"

    print("KERNEL_OK")
</pallas_src>

<mosaic_0001>
module attributes {stable_mosaic.version = 11 : i64} {
  func.func @_mlp_kernel(%arg0: i32, %arg1: memref<16x282xbf16, #tpu.memory_space<vmem>>, %arg2: memref<282x256xbf16, #tpu.memory_space<vmem>>, %arg3: memref<1x256xf32, #tpu.memory_space<vmem>>, %arg4: memref<256x128xbf16, #tpu.memory_space<vmem>>, %arg5: memref<1x128xf32, #tpu.memory_space<vmem>>, %arg6: memref<128x128xbf16, #tpu.memory_space<vmem>>, %arg7: memref<1x128xf32, #tpu.memory_space<vmem>>, %arg8: memref<128x128xbf16, #tpu.memory_space<vmem>>, %arg9: memref<1x128xf32, #tpu.memory_space<vmem>>, %arg10: memref<128x128xbf16, #tpu.memory_space<vmem>>, %arg11: memref<1x128xf32, #tpu.memory_space<vmem>>, %arg12: memref<128x1xbf16, #tpu.memory_space<vmem>>, %arg13: memref<1x1xf32, #tpu.memory_space<vmem>>, %arg14: memref<16x1xf32, #tpu.memory_space<vmem>>) attributes {dimension_semantics = [#tpu.dimension_semantics<parallel>], iteration_bounds = array<i64: 1>, scalar_prefetch = 0 : i64, scratch_operands = 0 : i64, tpu.core_type = #tpu.core_type<tc>, window_params = [{transform_indices = @transform_0, window_bounds = array<i64: 16, 282>}, {pipeline_mode = #tpu.pipeline_mode<synchronous>, transform_indices = @transform_1, window_bounds = array<i64: 282, 256>}, {pipeline_mode = #tpu.pipeline_mode<synchronous>, transform_indices = @transform_2, window_bounds = array<i64: 1, 256>}, {pipeline_mode = #tpu.pipeline_mode<synchronous>, transform_indices = @transform_3, window_bounds = array<i64: 256, 128>}, {pipeline_mode = #tpu.pipeline_mode<synchronous>, transform_indices = @transform_4, window_bounds = array<i64: 1, 128>}, {pipeline_mode = #tpu.pipeline_mode<synchronous>, transform_indices = @transform_5, window_bounds = array<i64: 128, 128>}, {pipeline_mode = #tpu.pipeline_mode<synchronous>, transform_indices = @transform_6, window_bounds = array<i64: 1, 128>}, {pipeline_mode = #tpu.pipeline_mode<synchronous>, transform_indices = @transform_7, window_bounds = array<i64: 128, 128>}, {pipeline_mode = #tpu.pipeline_mode<synchronous>, transform_indices = @transform_8, window_bounds = array<i64: 1, 128>}, {pipeline_mode = #tpu.pipeline_mode<synchronous>, transform_indices = @transform_9, window_bounds = array<i64: 128, 128>}, {pipeline_mode = #tpu.pipeline_mode<synchronous>, transform_indices = @transform_10, window_bounds = array<i64: 1, 128>}, {pipeline_mode = #tpu.pipeline_mode<synchronous>, transform_indices = @transform_11, window_bounds = array<i64: 128, 1>}, {pipeline_mode = #tpu.pipeline_mode<synchronous>, transform_indices = @transform_12, window_bounds = array<i64: 1, 1>}, {transform_indices = @transform_13, window_bounds = array<i64: 16, 1>}]} {
    %c0 = arith.constant 0 : index
    %c0_0 = arith.constant 0 : index
    %0 = vector.load %arg1[%c0, %c0_0] : memref<16x282xbf16, #tpu.memory_space<vmem>>, vector<16x282xbf16>
    %c0_1 = arith.constant 0 : index
    %c0_2 = arith.constant 0 : index
    %1 = vector.load %arg2[%c0_1, %c0_2] : memref<282x256xbf16, #tpu.memory_space<vmem>>, vector<282x256xbf16>
    %cst = arith.constant dense<0.000000e+00> : vector<16x256xf32>
    %2 = tpu.matmul %0, %1, %cst {dimension_numbers = #tpu.dot_dimension_numbers<[1], [0], [0], [1], [0, 0, 1, 1], [], []>} : vector<16x282xbf16>, vector<282x256xbf16>, vector<16x256xf32> -> vector<16x256xf32>
    %c0_3 = arith.constant 0 : index
    %c0_4 = arith.constant 0 : index
    %3 = vector.load %arg3[%c0_3, %c0_4] : memref<1x256xf32, #tpu.memory_space<vmem>>, vector<1x256xf32>
    %4 = vector.broadcast %3 : vector<1x256xf32> to vector<16x256xf32>
    %5 = arith.addf %2, %4 : vector<16x256xf32>
    %cst_5 = arith.constant 0.000000e+00 : f32
    %6 = vector.broadcast %cst_5 : f32 to vector<16x256xf32>
    %7 = arith.maximumf %5, %6 : vector<16x256xf32>
    %8 = arith.truncf %7 : vector<16x256xf32> to vector<16x256xbf16>
    %c0_6 = arith.constant 0 : index
    %c0_7 = arith.constant 0 : index
    %9 = vector.load %arg4[%c0_6, %c0_7] : memref<256x128xbf16, #tpu.memory_space<vmem>>, vector<256x128xbf16>
    %cst_8 = arith.constant dense<0.000000e+00> : vector<16x128xf32>
    %10 = tpu.matmul %8, %9, %cst_8 {dimension_numbers = #tpu.dot_dimension_numbers<[1], [0], [0], [1], [0, 0, 1, 1], [], []>} : vector<16x256xbf16>, vector<256x128xbf16>, vector<16x128xf32> -> vector<16x128xf32>
    %c0_9 = arith.constant 0 : index
    %c0_10 = arith.constant 0 : index
    %11 = vector.load %arg5[%c0_9, %c0_10] : memref<1x128xf32, #tpu.memory_space<vmem>>, vector<1x128xf32>
    %12 = vector.broadcast %11 : vector<1x128xf32> to vector<16x128xf32>
    %13 = arith.addf %10, %12 : vector<16x128xf32>
    %14 = arith.negf %13 : vector<16x128xf32>
    %15 = math.exp %14 : vector<16x128xf32>
    %cst_11 = arith.constant 1.000000e+00 : f32
    %16 = vector.broadcast %cst_11 : f32 to vector<16x128xf32>
    %17 = arith.addf %16, %15 : vector<16x128xf32>
    %18 = arith.divf %16, %17 : vector<16x128xf32>
    %19 = arith.truncf %18 : vector<16x128xf32> to vector<16x128xbf16>
    %c0_12 = arith.constant 0 : index
    %c0_13 = arith.constant 0 : index
    %20 = vector.load %arg6[%c0_12, %c0_13] : memref<128x128xbf16, #tpu.memory_space<vmem>>, vector<128x128xbf16>
    %cst_14 = arith.constant dense<0.000000e+00> : vector<16x128xf32>
    %21 = tpu.matmul %19, %20, %cst_14 {dimension_numbers = #tpu.dot_dimension_numbers<[1], [0], [0], [1], [0, 0, 1, 1], [], []>} : vector<16x128xbf16>, vector<128x128xbf16>, vector<16x128xf32> -> vector<16x128xf32>
    %c0_15 = arith.constant 0 : index
    %c0_16 = arith.constant 0 : index
    %22 = vector.load %arg7[%c0_15, %c0_16] : memref<1x128xf32, #tpu.memory_space<vmem>>, vector<1x128xf32>
    %23 = vector.broadcast %22 : vector<1x128xf32> to vector<16x128xf32>
    %24 = arith.addf %21, %23 : vector<16x128xf32>
    %25 = arith.negf %24 : vector<16x128xf32>
    %26 = math.exp %25 : vector<16x128xf32>
    %cst_17 = arith.constant 1.000000e+00 : f32
    %27 = vector.broadcast %cst_17 : f32 to vector<16x128xf32>
    %28 = arith.addf %27, %26 : vector<16x128xf32>
    %29 = arith.divf %27, %28 : vector<16x128xf32>
    %30 = arith.truncf %29 : vector<16x128xf32> to vector<16x128xbf16>
    %c0_18 = arith.constant 0 : index
    %c0_19 = arith.constant 0 : index
    %31 = vector.load %arg8[%c0_18, %c0_19] : memref<128x128xbf16, #tpu.memory_space<vmem>>, vector<128x128xbf16>
    %cst_20 = arith.constant dense<0.000000e+00> : vector<16x128xf32>
    %32 = tpu.matmul %30, %31, %cst_20 {dimension_numbers = #tpu.dot_dimension_numbers<[1], [0], [0], [1], [0, 0, 1, 1], [], []>} : vector<16x128xbf16>, vector<128x128xbf16>, vector<16x128xf32> -> vector<16x128xf32>
    %c0_21 = arith.constant 0 : index
    %c0_22 = arith.constant 0 : index
    %33 = vector.load %arg9[%c0_21, %c0_22] : memref<1x128xf32, #tpu.memory_space<vmem>>, vector<1x128xf32>
    %34 = vector.broadcast %33 : vector<1x128xf32> to vector<16x128xf32>
    %35 = arith.addf %32, %34 : vector<16x128xf32>
    %36 = arith.negf %35 : vector<16x128xf32>
    %37 = math.exp %36 : vector<16x128xf32>
    %cst_23 = arith.constant 1.000000e+00 : f32
    %38 = vector.broadcast %cst_23 : f32 to vector<16x128xf32>
    %39 = arith.addf %38, %37 : vector<16x128xf32>
    %40 = arith.divf %38, %39 : vector<16x128xf32>
    %41 = arith.truncf %40 : vector<16x128xf32> to vector<16x128xbf16>
    %c0_24 = arith.constant 0 : index
    %c0_25 = arith.constant 0 : index
    %42 = vector.load %arg10[%c0_24, %c0_25] : memref<128x128xbf16, #tpu.memory_space<vmem>>, vector<128x128xbf16>
    %cst_26 = arith.constant dense<0.000000e+00> : vector<16x128xf32>
    %43 = tpu.matmul %41, %42, %cst_26 {dimension_numbers = #tpu.dot_dimension_numbers<[1], [0], [0], [1], [0, 0, 1, 1], [], []>} : vector<16x128xbf16>, vector<128x128xbf16>, vector<16x128xf32> -> vector<16x128xf32>
    %c0_27 = arith.constant 0 : index
    %c0_28 = arith.constant 0 : index
    %44 = vector.load %arg11[%c0_27, %c0_28] : memref<1x128xf32, #tpu.memory_space<vmem>>, vector<1x128xf32>
    %45 = vector.broadcast %44 : vector<1x128xf32> to vector<16x128xf32>
    %46 = arith.addf %43, %45 : vector<16x128xf32>
    %47 = arith.negf %46 : vector<16x128xf32>
    %48 = math.exp %47 : vector<16x128xf32>
    %cst_29 = arith.constant 1.000000e+00 : f32
    %49 = vector.broadcast %cst_29 : f32 to vector<16x128xf32>
    %50 = arith.addf %49, %48 : vector<16x128xf32>
    %51 = arith.divf %49, %50 : vector<16x128xf32>
    %52 = arith.truncf %51 : vector<16x128xf32> to vector<16x128xbf16>
    %c0_30 = arith.constant 0 : index
    %c0_31 = arith.constant 0 : index
    %53 = vector.load %arg12[%c0_30, %c0_31] : memref<128x1xbf16, #tpu.memory_space<vmem>>, vector<128x1xbf16>
    %cst_32 = arith.constant dense<0.000000e+00> : vector<16x1xf32>
    %54 = tpu.matmul %52, %53, %cst_32 {dimension_numbers = #tpu.dot_dimension_numbers<[1], [0], [0], [1], [0, 0, 1, 1], [], []>} : vector<16x128xbf16>, vector<128x1xbf16>, vector<16x1xf32> -> vector<16x1xf32>
    %c0_33 = arith.constant 0 : index
    %c0_34 = arith.constant 0 : index
    %55 = vector.load %arg13[%c0_33, %c0_34] : memref<1x1xf32, #tpu.memory_space<vmem>>, vector<1x1xf32>
    %56 = vector.broadcast %55 : vector<1x1xf32> to vector<16x1xf32>
    %57 = arith.addf %54, %56 : vector<16x1xf32>
    %cst_35 = arith.constant 0.000000e+00 : f32
    %58 = vector.broadcast %cst_35 : f32 to vector<16x1xf32>
    %59 = arith.maximumf %57, %58 : vector<16x1xf32>
    %c0_36 = arith.constant 0 : index
    %c0_37 = arith.constant 0 : index
    %60 = vector.load %arg14[%c0_36, %c0_37] : memref<16x1xf32, #tpu.memory_space<vmem>>, vector<16x1xf32>
    tpu.vector_store %arg14[%c0_36, %c0_37], %59 {strides = array<i32>} : memref<16x1xf32, #tpu.memory_space<vmem>>, vector<16x1xf32>,
    return
  }
  func.func @transform_0(%arg0: i32) -> (i32, i32) {
    %c0_i32 = arith.constant 0 : i32
    %c0_i32_0 = arith.constant 0 : i32
    return %arg0, %c0_i32 : i32, i32
  }
  func.func @transform_1(%arg0: i32) -> (i32, i32) {
    %c0_i32 = arith.constant 0 : i32
    %c0_i32_0 = arith.constant 0 : i32
    %c0_i32_1 = arith.constant 0 : i32
    return %c0_i32, %c0_i32_0 : i32, i32
  }
  func.func @transform_2(%arg0: i32) -> (i32, i32) {
    %c0_i32 = arith.constant 0 : i32
    %c0_i32_0 = arith.constant 0 : i32
    %c0_i32_1 = arith.constant 0 : i32
    return %c0_i32, %c0_i32_0 : i32, i32
  }
  func.func @transform_3(%arg0: i32) -> (i32, i32) {
    %c0_i32 = arith.constant 0 : i32
    %c0_i32_0 = arith.constant 0 : i32
    %c0_i32_1 = arith.constant 0 : i32
    return %c0_i32, %c0_i32_0 : i32, i32
  }
  func.func @transform_4(%arg0: i32) -> (i32, i32) {
    %c0_i32 = arith.constant 0 : i32
    %c0_i32_0 = arith.constant 0 : i32
    %c0_i32_1 = arith.constant 0 : i32
    return %c0_i32, %c0_i32_0 : i32, i32
  }
  func.func @transform_5(%arg0: i32) -> (i32, i32) {
    %c0_i32 = arith.constant 0 : i32
    %c0_i32_0 = arith.constant 0 : i32
    %c0_i32_1 = arith.constant 0 : i32
    return %c0_i32, %c0_i32_0 : i32, i32
  }
  func.func @transform_6(%arg0: i32) -> (i32, i32) {
    %c0_i32 = arith.constant 0 : i32
    %c0_i32_0 = arith.constant 0 : i32
    %c0_i32_1 = arith.constant 0 : i32
    return %c0_i32, %c0_i32_0 : i32, i32
  }
  func.func @transform_7(%arg0: i32) -> (i32, i32) {
    %c0_i32 = arith.constant 0 : i32
    %c0_i32_0 = arith.constant 0 : i32
    %c0_i32_1 = arith.constant 0 : i32
    return %c0_i32, %c0_i32_0 : i32, i32
  }
  func.func @transform_8(%arg0: i32) -> (i32, i32) {
    %c0_i32 = arith.constant 0 : i32
    %c0_i32_0 = arith.constant 0 : i32
    %c0_i32_1 = arith.constant 0 : i32
    return %c0_i32, %c0_i32_0 : i32, i32
  }
  func.func @transform_9(%arg0: i32) -> (i32, i32) {
    %c0_i32 = arith.constant 0 : i32
    %c0_i32_0 = arith.constant 0 : i32
    %c0_i32_1 = arith.constant 0 : i32
    return %c0_i32, %c0_i32_0 : i32, i32
  }
  func.func @transform_10(%arg0: i32) -> (i32, i32) {
    %c0_i32 = arith.constant 0 : i32
    %c0_i32_0 = arith.constant 0 : i32
    %c0_i32_1 = arith.constant 0 : i32
    return %c0_i32, %c0_i32_0 : i32, i32
  }
  func.func @transform_11(%arg0: i32) -> (i32, i32) {
    %c0_i32 = arith.constant 0 : i32
    %c0_i32_0 = arith.constant 0 : i32
    %c0_i32_1 = arith.constant 0 : i32
    return %c0_i32, %c0_i32_0 : i32, i32
  }
  func.func @transform_12(%arg0: i32) -> (i32, i32) {
    %c0_i32 = arith.constant 0 : i32
    %c0_i32_0 = arith.constant 0 : i32
    %c0_i32_1 = arith.constant 0 : i32
    return %c0_i32, %c0_i32_0 : i32, i32
  }
  func.func @transform_13(%arg0: i32) -> (i32, i32) {
    %c0_i32 = arith.constant 0 : i32
    %c0_i32_0 = arith.constant 0 : i32
    return %arg0, %c0_i32 : i32, i32
  }
}

</mosaic_0001>

<llo_original>
// kernel: mlp_forward.1
$region0: #{mlp_forward.1}
  #allocation0 [shape = 'u32[]', space=smem, size = 0x4, offset = 0x4, fixed_abs, tag = 'smem constant byte address 0x4 - core index']
  #allocation1 [shape = 'u32[144,128]{1,0:T(1,128)}', space=vmem, size = 0x12000, scoped, tag = 'internal scratch']
  #allocation2 [shape = 'f32[1,1]{1,0:T(1,128)S(1)}', space=vmem, size = 0x200, scoped, tag = 'scoped memory for mlp_forward.1']
  %s0 = inlined_call_operand.vmem [shape: bf16[16,282], index: 0, kind: input, shape index: {}]
  %s1 = inlined_call_operand.vmem [shape: bf16[282,256], index: 1, kind: input, shape index: {}]
  %s2 = inlined_call_operand.vmem [shape: f32[1,256], index: 2, kind: input, shape index: {}]
  %s3 = inlined_call_operand.vmem [shape: bf16[256,128], index: 3, kind: input, shape index: {}]
  %s4 = inlined_call_operand.vmem [shape: f32[1,128], index: 4, kind: input, shape index: {}]
  %s5 = inlined_call_operand.vmem [shape: bf16[128,128], index: 5, kind: input, shape index: {}]
  %s6 = inlined_call_operand.vmem [shape: f32[1,128], index: 6, kind: input, shape index: {}]
  %s7 = inlined_call_operand.vmem [shape: bf16[128,128], index: 7, kind: input, shape index: {}]
  %s8 = inlined_call_operand.vmem [shape: f32[1,128], index: 8, kind: input, shape index: {}]
  %s9 = inlined_call_operand.vmem [shape: bf16[128,128], index: 9, kind: input, shape index: {}]
  %s10 = inlined_call_operand.vmem [shape: f32[1,128], index: 10, kind: input, shape index: {}]
  %s11 = inlined_call_operand.vmem [shape: bf16[128,1], index: 11, kind: input, shape index: {}]
  %s12 = inlined_call_operand.<no memory space> [shape: f32[1,1], index: 12, kind: input, shape index: {}]
  %s13 = inlined_call_operand.vmem [shape: f32[16,1], index: 13, kind: output, shape index: {}]
  %s14 = sld [smem:[#allocation0]]
  $region62: #{mlp_forward.1} parent=0
    _
  %s16 = ssub.s32 1, %s14
  %s17 = scalar_select 0, %s16, %s14
  %v18 = vstv %s12
  %19 = vst [vmem:[#allocation2] sm:$0x1] %v18
  // Predicated region
  $region2: #{mlp_forward.1} parent=0 // pred_check
    _
  $region3: #{mlp_forward.1} parent=0 // pred_check_branch
    %21 = sbr.rel (0) target = $region5
  $region4: #{mlp_forward.1} parent=0 // pred_region
    _
  $region5: #{mlp_forward.1} parent=0 // pred_fallthru
    _
  // Predicated region
  $region6: #{mlp_forward.1} parent=0 // pred_check
    _
  $region7: #{mlp_forward.1} parent=0 // pred_check_branch
    %23 = sbr.rel (0) target = $region9
  $region8: #{mlp_forward.1} parent=0 // pred_region
    _
  $region9: #{mlp_forward.1} parent=0 // pred_fallthru
    _
  // Predicated region
  $region10: #{mlp_forward.1} parent=0 // pred_check
    _
  $region11: #{mlp_forward.1} parent=0 // pred_check_branch
    %25 = sbr.rel (0) target = $region13
  $region12: #{mlp_forward.1} parent=0 // pred_region
    _
  $region13: #{mlp_forward.1} parent=0 // pred_fallthru
    _
  // Predicated region
  $region14: #{mlp_forward.1} parent=0 // pred_check
    _
  $region15: #{mlp_forward.1} parent=0 // pred_check_branch
    %27 = sbr.rel (0) target = $region17
  $region16: #{mlp_forward.1} parent=0 // pred_region
    _
  $region17: #{mlp_forward.1} parent=0 // pred_fallthru
    _
  // Predicated region
  $region18: #{mlp_forward.1} parent=0 // pred_check
    _
  $region19: #{mlp_forward.1} parent=0 // pred_check_branch
    %29 = sbr.rel (0) target = $region21
  $region20: #{mlp_forward.1} parent=0 // pred_region
    _
  $region21: #{mlp_forward.1} parent=0 // pred_fallthru
    _
  // Predicated region
  $region22: #{mlp_forward.1} parent=0 // pred_check
    _
  $region23: #{mlp_forward.1} parent=0 // pred_check_branch
    %31 = sbr.rel (0) target = $region25
  $region24: #{mlp_forward.1} parent=0 // pred_region
    _
  $region25: #{mlp_forward.1} parent=0 // pred_fallthru
    _
  // Predicated region
  $region26: #{mlp_forward.1} parent=0 // pred_check
    _
  $region27: #{mlp_forward.1} parent=0 // pred_check_branch
    %33 = sbr.rel (0) target = $region29
  $region28: #{mlp_forward.1} parent=0 // pred_region
    _
  $region29: #{mlp_forward.1} parent=0 // pred_fallthru
    _
  // Predicated region
  $region30: #{mlp_forward.1} parent=0 // pred_check
    _
  $region31: #{mlp_forward.1} parent=0 // pred_check_branch
    %35 = sbr.rel (0) target = $region33
  $region32: #{mlp_forward.1} parent=0 // pred_region
    _
  $region33: #{mlp_forward.1} parent=0 // pred_fallthru
    _
  // Predicated region
  $region34: #{mlp_forward.1} parent=0 // pred_check
    _
  $region35: #{mlp_forward.1} parent=0 // pred_check_branch
    %37 = sbr.rel (0) target = $region37
  $region36: #{mlp_forward.1} parent=0 // pred_region
    _
  $region37: #{mlp_forward.1} parent=0 // pred_fallthru
    _
  // Predicated region
  $region38: #{mlp_forward.1} parent=0 // pred_check
    _
  $region39: #{mlp_forward.1} parent=0 // pred_check_branch
    %39 = sbr.rel (0) target = $region41
  $region40: #{mlp_forward.1} parent=0 // pred_region
    _
  $region41: #{mlp_forward.1} parent=0 // pred_fallthru
    _
  // Predicated region
  $region42: #{mlp_forward.1} parent=0 // pred_check
    _
  $region43: #{mlp_forward.1} parent=0 // pred_check_branch
    %41 = sbr.rel (0) target = $region45
  $region44: #{mlp_forward.1} parent=0 // pred_region
    _
  $region45: #{mlp_forward.1} parent=0 // pred_fallthru
    _
  // Predicated region
  $region46: #{mlp_forward.1} parent=0 // pred_check
    _
  $region47: #{mlp_forward.1} parent=0 // pred_check_branch
    %43 = sbr.rel (0) target = $region49
  $region48: #{mlp_forward.1} parent=0 // pred_region
    _
  $region49: #{mlp_forward.1} parent=0 // pred_fallthru
    _
  // Predicated region
  $region50: #{mlp_forward.1} parent=0 // pred_check
    _
  $region51: #{mlp_forward.1} parent=0 // pred_check_branch
    %45 = sbr.rel (0) target = $region53
  $region52: #{mlp_forward.1} parent=0 // pred_region
    _
  $region53: #{mlp_forward.1} parent=0 // pred_fallthru
    _
  %v47 = vld [vmem:[%s0] sm:$0xff]
  %v48 = vld [vmem:[%s0 + $0x8] sm:$0xf]
  %v49 = vld [vmem:[%s0 + $0xc] sm:$0xff]
  %v50 = vld [vmem:[%s0 + $0x14] sm:$0xf]
  %v51 = vld [vmem:[%s1] sm:$0xff]
  %v52 = vld [vmem:[%s1 + $0x8] sm:$0xff]
  %v53 = vld [vmem:[%s1 + $0x10] sm:$0xff]
  %v54 = vld [vmem:[%s1 + $0x18] sm:$0xff]
  %v55 = vld [vmem:[%s1 + $0x20] sm:$0xff]
  %v56 = vld [vmem:[%s1 + $0x28] sm:$0xff]
  %v57 = vld [vmem:[%s1 + $0x30] sm:$0xff]
  %v58 = vld [vmem:[%s1 + $0x38] sm:$0xff]
  %v59 = vld [vmem:[%s1 + $0x40] sm:$0xff]
  %v60 = vld [vmem:[%s1 + $0x48] sm:$0xff]
  %v61 = vld [vmem:[%s1 + $0x50] sm:$0xff]
  %v62 = vld [vmem:[%s1 + $0x58] sm:$0xff]
  %v63 = vld [vmem:[%s1 + $0x60] sm:$0xff]
  %v64 = vld [vmem:[%s1 + $0x68] sm:$0xff]
  %v65 = vld [vmem:[%s1 + $0x70] sm:$0xff]
  %v66 = vld [vmem:[%s1 + $0x78] sm:$0xff]
  %v67 = vld [vmem:[%s1 + $0x80] sm:$0xff]
  %v68 = vld [vmem:[%s1 + $0x88] sm:$0xff]
  %v69 = vld [vmem:[%s1 + $0x90] sm:$0xff]
  %v70 = vld [vmem:[%s1 + $0x98] sm:$0xff]
  %v71 = vld [vmem:[%s1 + $0xa0] sm:$0xff]
  %v72 = vld [vmem:[%s1 + $0xa8] sm:$0xff]
  %v73 = vld [vmem:[%s1 + $0xb0] sm:$0xff]
  %v74 = vld [vmem:[%s1 + $0xb8] sm:$0xff]
  %v75 = vld [vmem:[%s1 + $0xc0] sm:$0xff]
  %v76 = vld [vmem:[%s1 + $0xc8] sm:$0xff]
  %v77 = vld [vmem:[%s1 + $0xd0] sm:$0xff]
  %v78 = vld [vmem:[%s1 + $0xd8] sm:$0xff]
  %v79 = vld [vmem:[%s1 + $0xe0] sm:$0xff]
  %v80 = vld [vmem:[%s1 + $0xe8] sm:$0xff]
  %v81 = vld [vmem:[%s1 + $0xf0] sm:$0xff]
  %v82 = vld [vmem:[%s1 + $0xf8] sm:$0xff]
  %v83 = vld [vmem:[%s1 + $0x100] sm:$0xff]
  %v84 = vld [vmem:[%s1 + $0x108] sm:$0xff]
  %v85 = vld [vmem:[%s1 + $0x110] sm:$0xff]
  %v86 = vld [vmem:[%s1 + $0x118] sm:$0x11]
  %v87 = vld [vmem:[%s2] sm:$0x3]
  %v89 = vlaneseq
  %v90 = vshrl.u32 %v89, 7
  %v91 = vsub.s32 0, %v90
  %v92 = vrot.slane %v87, %v91
  %v93 = vlaneseq
  %v94 = vshrl.u32 %v93, 7
  %v95 = vsub.s32 1, %v94
  %v96 = vrot.slane %v87, %v95
  %v103 = vunpack.c.l.b16 %v47
  %v104 = vunpack.c.h.b16 %v47
  %v105 = vunpack.c.l.b16 %v48
  %v106 = vunpack.c.l.b16 %v49
  %v107 = vunpack.c.h.b16 %v49
  %v108 = vunpack.c.l.b16 %v50
  %v109 = vpack.c.b16 %v106, %v103
  %v110 = vpack.c.b16 %v107, %v104
  %v111 = vpack.c.b16 %v108, %v105
  %v150 = vunpack.c.l.b16 %v51
  %v151 = vunpack.c.h.b16 %v51
  %v152 = vunpack.c.l.b16 %v52
  %v153 = vunpack.c.h.b16 %v52
  %v154 = vunpack.c.l.b16 %v53
  %v155 = vunpack.c.h.b16 %v53
  %v156 = vunpack.c.l.b16 %v54
  %v157 = vunpack.c.h.b16 %v54
  %v158 = vunpack.c.l.b16 %v55
  %v159 = vunpack.c.h.b16 %v55
  %v160 = vunpack.c.l.b16 %v56
  %v161 = vunpack.c.h.b16 %v56
  %v162 = vunpack.c.l.b16 %v57
  %v163 = vunpack.c.h.b16 %v57
  %v164 = vunpack.c.l.b16 %v58
  %v165 = vunpack.c.h.b16 %v58
  %v166 = vunpack.c.l.b16 %v59
  %v167 = vunpack.c.h.b16 %v59
  %v168 = vunpack.c.l.b16 %v60
  %v169 = vunpack.c.h.b16 %v60
  %v170 = vunpack.c.l.b16 %v61
  %v171 = vunpack.c.h.b16 %v61
  %v172 = vunpack.c.l.b16 %v62
  %v173 = vunpack.c.h.b16 %v62
  %v174 = vunpack.c.l.b16 %v63
  %v175 = vunpack.c.h.b16 %v63
  %v176 = vunpack.c.l.b16 %v64
  %v177 = vunpack.c.h.b16 %v64
  %v178 = vunpack.c.l.b16 %v65
  %v179 = vunpack.c.h.b16 %v65
  %v180 = vunpack.c.l.b16 %v66
  %v181 = vunpack.c.h.b16 %v66
  %v182 = vunpack.c.l.b16 %v67
  %v183 = vunpack.c.h.b16 %v67
  %v184 = vunpack.c.l.b16 %v68
  %v185 = vunpack.c.h.b16 %v68
  %v186 = vunpack.c.l.b16 %v69
  %v187 = vunpack.c.h.b16 %v69
  %v188 = vunpack.c.l.b16 %v70
  %v189 = vunpack.c.h.b16 %v70
  %v190 = vunpack.c.l.b16 %v71
  %v191 = vunpack.c.h.b16 %v71
  %v192 = vunpack.c.l.b16 %v72
  %v193 = vunpack.c.h.b16 %v72
  %v194 = vunpack.c.l.b16 %v73
  %v195 = vunpack.c.h.b16 %v73
  %v196 = vunpack.c.l.b16 %v74
  %v197 = vunpack.c.h.b16 %v74
  %v198 = vunpack.c.l.b16 %v75
  %v199 = vunpack.c.h.b16 %v75
  %v200 = vunpack.c.l.b16 %v76
  %v201 = vunpack.c.h.b16 %v76
  %v202 = vunpack.c.l.b16 %v77
  %v203 = vunpack.c.h.b16 %v77
  %v204 = vunpack.c.l.b16 %v78
  %v205 = vunpack.c.h.b16 %v78
  %v206 = vunpack.c.l.b16 %v79
  %v207 = vunpack.c.h.b16 %v79
  %v208 = vunpack.c.l.b16 %v80
  %v209 = vunpack.c.h.b16 %v80
  %v210 = vunpack.c.l.b16 %v81
  %v211 = vunpack.c.h.b16 %v81
  %v212 = vunpack.c.l.b16 %v82
  %v213 = vunpack.c.h.b16 %v82
  %v214 = vunpack.c.l.b16 %v83
  %v215 = vunpack.c.h.b16 %v83
  %v216 = vunpack.c.l.b16 %v84
  %v217 = vunpack.c.h.b16 %v84
  %v218 = vunpack.c.l.b16 %v85
  %v219 = vunpack.c.h.b16 %v85
  %v220 = vunpack.c.l.b16 %v86
  %v221 = vunpack.c.h.b16 %v86
  %v222 = vpack.c.b16 %v152, %v150
  %v223 = vpack.c.b16 %v153, %v151
  %v224 = vpack.c.b16 %v156, %v154
  %v225 = vpack.c.b16 %v157, %v155
  %v226 = vpack.c.b16 %v160, %v158
  %v227 = vpack.c.b16 %v161, %v159
  %v228 = vpack.c.b16 %v164, %v162
  %v229 = vpack.c.b16 %v165, %v163
  %v230 = vpack.c.b16 %v168, %v166
  %v231 = vpack.c.b16 %v169, %v167
  %v232 = vpack.c.b16 %v172, %v170
  %v233 = vpack.c.b16 %v173, %v171
  %v234 = vpack.c.b16 %v176, %v174
  %v235 = vpack.c.b16 %v177, %v175
  %v236 = vpack.c.b16 %v180, %v178
  %v237 = vpack.c.b16 %v181, %v179
  %v238 = vpack.c.b16 %v184, %v182
  %v239 = vpack.c.b16 %v185, %v183
  %v240 = vpack.c.b16 %v188, %v186
  %v241 = vpack.c.b16 %v189, %v187
  %v242 = vpack.c.b16 %v192, %v190
  %v243 = vpack.c.b16 %v193, %v191
  %v244 = vpack.c.b16 %v196, %v194
  %v245 = vpack.c.b16 %v197, %v195
  %v246 = vpack.c.b16 %v200, %v198
  %v247 = vpack.c.b16 %v201, %v199
  %v248 = vpack.c.b16 %v204, %v202
  %v249 = vpack.c.b16 %v205, %v203
  %v250 = vpack.c.b16 %v208, %v206
  %v251 = vpack.c.b16 %v209, %v207
  %v252 = vpack.c.b16 %v212, %v210
  %v253 = vpack.c.b16 %v213, %v211
  %v254 = vpack.c.b16 %v216, %v214
  %v255 = vpack.c.b16 %v217, %v215
  %v256 = vpack.c.b16 %v220, %v218
  %v257 = vpack.c.b16 %v221, %v219
  %vm292 = vcmask 211968
  %v294 = vsel %vm292, %v111, 0
  %vm296 = vcmask 1044480
  %v298 = vsel %vm296, %v256, 0
  %v301 = vsel %vm296, %v257, 0
  %303 = vmatprep.subr.bf16.mxu0 %v223
  %304 = vmatpush1.bf16.msra.mxu0 %v222
  %305 = vmatprep.subr.bf16.mxu0 %v225
  %306 = vmatpush1.bf16.msra.mxu0 %v224
  %307 = vmatprep.subr.bf16.mxu0 %v227
  %308 = vmatpush1.bf16.msra.mxu0 %v226
  %309 = vmatprep.subr.bf16.mxu0 %v229
  %310 = vmatpush1.bf16.msra.mxu0 %v228
  %311 = vmatprep.subr.bf16.mxu0 %v231
  %312 = vmatpush1.bf16.msra.mxu0 %v230
  %313 = vmatprep.subr.bf16.mxu0 %v233
  %314 = vmatpush1.bf16.msra.mxu0 %v232
  %315 = vmatprep.subr.bf16.mxu0 %v235
  %316 = vmatpush1.bf16.msra.mxu0 %v234
  %317 = vmatprep.subr.bf16.mxu0 %v237
  %318 = vmatpush1.bf16.msra.mxu0 %v236
  %319 = vmatprep.subr.bf16.mxu0 %v239
  %320 = vmatpush1.bf16.msra.mxu0 %v238
  %321 = vmatprep.subr.bf16.mxu0 %v241
  %322 = vmatpush1.bf16.msra.mxu0 %v240
  %323 = vmatprep.subr.bf16.mxu0 %v243
  %324 = vmatpush1.bf16.msra.mxu0 %v242
  %325 = vmatprep.subr.bf16.mxu0 %v245
  %326 = vmatpush1.bf16.msra.mxu0 %v244
  %327 = vmatprep.subr.bf16.mxu0 %v247
  %328 = vmatpush1.bf16.msra.mxu0 %v246
  %329 = vmatprep.subr.bf16.mxu0 %v249
  %330 = vmatpush1.bf16.msra.mxu0 %v248
  %331 = vmatprep.subr.bf16.mxu0 %v251
  %332 = vmatpush1.bf16.msra.mxu0 %v250
  %333 = vmatprep.subr.bf16.mxu0 %v253
  %334 = vmatpush1.bf16.msra.mxu0 %v252
  %335 = vmatprep.mubr.bf16.mxu0 %v110
  %336 = vmatmul.mubr.bf16.gmra.mrb[0].mxu0 %v109
  %v337 = vpop.f32.mrb[0].mxu0
  %v338 = vadd.f32 %v92, %v337
  %v339 = vpop.f32.mrb[0].mxu0
  %v340 = vadd.f32 %v96, %v339
  %v341 = vpop.f32.mrb[0].mxu0
  %v342 = vadd.f32 %v92, %v341
  %v343 = vpop.f32.mrb[0].mxu0
  %v344 = vadd.f32 %v96, %v343
  %345 = vdwg.mxu0
  %346 = vmatprep.subr.bf16.mxu0 %v255
  %347 = vmatpush1.bf16.msra.mxu0 %v254
  %348 = vmatprep.subr.bf16.mxu0 %v301
  %349 = vmatpush1.bf16.msra.mxu0 %v298
  %350 = vmatprep.subr.bf16.mxu0 0
  %351 = vmatpush1.bf16.msra.mxu0 0
  %352 = vmatprep.subr.bf16.mxu0 0
  %353 = vmatpush1.bf16.msra.mxu0 0
  %354 = vmatprep.subr.bf16.mxu0 0
  %355 = vmatpush1.bf16.msra.mxu0 0
  %356 = vmatprep.subr.bf16.mxu0 0
  %357 = vmatpush1.bf16.msra.mxu0 0
  %358 = vmatprep.subr.bf16.mxu0 0
  %359 = vmatpush1.bf16.msra.mxu0 0
  %360 = vmatprep.subr.bf16.mxu0 0
  %361 = vmatpush1.bf16.msra.mxu0 0
  %362 = vmatprep.subr.bf16.mxu0 0
  %363 = vmatpush1.bf16.msra.mxu0 0
  %364 = vmatprep.subr.bf16.mxu0 0
  %365 = vmatpush1.bf16.msra.mxu0 0
  %366 = vmatprep.subr.bf16.mxu0 0
  %367 = vmatpush1.bf16.msra.mxu0 0
  %368 = vmatprep.subr.bf16.mxu0 0
  %369 = vmatpush1.bf16.msra.mxu0 0
  %370 = vmatprep.subr.bf16.mxu0 0
  %371 = vmatpush1.bf16.msra.mxu0 0
  %372 = vmatprep.subr.bf16.mxu0 0
  %373 = vmatpush1.bf16.msra.mxu0 0
  %374 = vmatprep.subr.bf16.mxu0 0
  %375 = vmatpush1.bf16.msra.mxu0 0
  %376 = vmatprep.subr.bf16.mxu0 0
  %377 = vmatpush1.bf16.msra.mxu0 0
  %378 = vmatprep.mubr.bf16.mxu0 0
  %379 = vmatmul.mubr.bf16.gmra.mrb[0].mxu0 %v294
  %v380 = vpop.f32.mrb[0].mxu0
  %v381 = vadd.f32 %v338, %v380
  %v382 = vpop.f32.mrb[0].mxu0
  %v383 = vadd.f32 %v340, %v382
  %v384 = vpop.f32.mrb[0].mxu0
  %v385 = vadd.f32 %v342, %v384
  %v386 = vpop.f32.mrb[0].mxu0
  %v387 = vadd.f32 %v344, %v386
  %388 = vdwg.mxu0
  %v389 = vmax.f32 %v381, 0.0
  %v390 = vmax.f32 %v383, 0.0
  %v391 = vmax.f32 %v385, 0.0
  %v392 = vmax.f32 %v387, 0.0
  %v393 = vpack.c.bf16 %v391, %v389
  %v394 = vpack.c.bf16 %v392, %v390
  %v395 = vld [vmem:[%s3] sm:$0xf]
  %v396 = vld [vmem:[%s3 + $0x4] sm:$0xf]
  %v397 = vld [vmem:[%s3 + $0x8] sm:$0xf]
  %v398 = vld [vmem:[%s3 + $0xc] sm:$0xf]
  %v399 = vld [vmem:[%s3 + $0x10] sm:$0xf]
  %v400 = vld [vmem:[%s3 + $0x14] sm:$0xf]
  %v401 = vld [vmem:[%s3 + $0x18] sm:$0xf]
  %v402 = vld [vmem:[%s3 + $0x1c] sm:$0xf]
  %v403 = vld [vmem:[%s3 + $0x20] sm:$0xf]
  %v404 = vld [vmem:[%s3 + $0x24] sm:$0xf]
  %v405 = vld [vmem:[%s3 + $0x28] sm:$0xf]
  %v406 = vld [vmem:[%s3 + $0x2c] sm:$0xf]
  %v407 = vld [vmem:[%s3 + $0x30] sm:$0xf]
  %v408 = vld [vmem:[%s3 + $0x34] sm:$0xf]
  %v409 = vld [vmem:[%s3 + $0x38] sm:$0xf]
  %v410 = vld [vmem:[%s3 + $0x3c] sm:$0xf]
  %v411 = vld [vmem:[%s3 + $0x40] sm:$0xf]
  %v412 = vld [vmem:[%s3 + $0x44] sm:$0xf]
  %v413 = vld [vmem:[%s3 + $0x48] sm:$0xf]
  %v414 = vld [vmem:[%s3 + $0x4c] sm:$0xf]
  %v415 = vld [vmem:[%s3 + $0x50] sm:$0xf]
  %v416 = vld [vmem:[%s3 + $0x54] sm:$0xf]
  %v417 = vld [vmem:[%s3 + $0x58] sm:$0xf]
  %v418 = vld [vmem:[%s3 + $0x5c] sm:$0xf]
  %v419 = vld [vmem:[%s3 + $0x60] sm:$0xf]
  %v420 = vld [vmem:[%s3 + $0x64] sm:$0xf]
  %v421 = vld [vmem:[%s3 + $0x68] sm:$0xf]
  %v422 = vld [vmem:[%s3 + $0x6c] sm:$0xf]
  %v423 = vld [vmem:[%s3 + $0x70] sm:$0xf]
  %v424 = vld [vmem:[%s3 + $0x74] sm:$0xf]
  %v425 = vld [vmem:[%s3 + $0x78] sm:$0xf]
  %v426 = vld [vmem:[%s3 + $0x7c] sm:$0xf]
  %v427 = vld [vmem:[%s4] sm:$0x1]
  %v429 = vlaneseq
  %v430 = vshrl.u32 %v429, 7
  %v431 = vsub.s32 0, %v430
  %v432 = vrot.slane %v427, %v431
  %v466 = vunpack.c.l.b16 %v395
  %v467 = vunpack.c.l.b16 %v396
  %v468 = vunpack.c.l.b16 %v397
  %v469 = vunpack.c.l.b16 %v398
  %v470 = vunpack.c.l.b16 %v399
  %v471 = vunpack.c.l.b16 %v400
  %v472 = vunpack.c.l.b16 %v401
  %v473 = vunpack.c.l.b16 %v402
  %v474 = vunpack.c.l.b16 %v403
  %v475 = vunpack.c.l.b16 %v404
  %v476 = vunpack.c.l.b16 %v405
  %v477 = vunpack.c.l.b16 %v406
  %v478 = vunpack.c.l.b16 %v407
  %v479 = vunpack.c.l.b16 %v408
  %v480 = vunpack.c.l.b16 %v409
  %v481 = vunpack.c.l.b16 %v410
  %v482 = vunpack.c.l.b16 %v411
  %v483 = vunpack.c.l.b16 %v412
  %v484 = vunpack.c.l.b16 %v413
  %v485 = vunpack.c.l.b16 %v414
  %v486 = vunpack.c.l.b16 %v415
  %v487 = vunpack.c.l.b16 %v416
  %v488 = vunpack.c.l.b16 %v417
  %v489 = vunpack.c.l.b16 %v418
  %v490 = vunpack.c.l.b16 %v419
  %v491 = vunpack.c.l.b16 %v420
  %v492 = vunpack.c.l.b16 %v421
  %v493 = vunpack.c.l.b16 %v422
  %v494 = vunpack.c.l.b16 %v423
  %v495 = vunpack.c.l.b16 %v424
  %v496 = vunpack.c.l.b16 %v425
  %v497 = vunpack.c.l.b16 %v426
  %v498 = vpack.c.b16 %v467, %v466
  %v499 = vpack.c.b16 %v469, %v468
  %v500 = vpack.c.b16 %v471, %v470
  %v501 = vpack.c.b16 %v473, %v472
  %v502 = vpack.c.b16 %v475, %v474
  %v503 = vpack.c.b16 %v477, %v476
  %v504 = vpack.c.b16 %v479, %v478
  %v505 = vpack.c.b16 %v481, %v480
  %v506 = vpack.c.b16 %v483, %v482
  %v507 = vpack.c.b16 %v485, %v484
  %v508 = vpack.c.b16 %v487, %v486
  %v509 = vpack.c.b16 %v489, %v488
  %v510 = vpack.c.b16 %v491, %v490
  %v511 = vpack.c.b16 %v493, %v492
  %v512 = vpack.c.b16 %v495, %v494
  %v513 = vpack.c.b16 %v497, %v496
  %530 = vmatprep.subr.bf16.mxu0 0
  %531 = vmatpush1.bf16.msra.mxu0 %v498
  %532 = vmatprep.subr.bf16.mxu0 0
  %533 = vmatpush1.bf16.msra.mxu0 %v499
  %534 = vmatprep.subr.bf16.mxu0 0
  %535 = vmatpush1.bf16.msra.mxu0 %v500
  %536 = vmatprep.subr.bf16.mxu0 0
  %537 = vmatpush1.bf16.msra.mxu0 %v501
  %538 = vmatprep.subr.bf16.mxu0 0
  %539 = vmatpush1.bf16.msra.mxu0 %v502
  %540 = vmatprep.subr.bf16.mxu0 0
  %541 = vmatpush1.bf16.msra.mxu0 %v503
  %542 = vmatprep.subr.bf16.mxu0 0
  %543 = vmatpush1.bf16.msra.mxu0 %v504
  %544 = vmatprep.subr.bf16.mxu0 0
  %545 = vmatpush1.bf16.msra.mxu0 %v505
  %546 = vmatprep.subr.bf16.mxu0 0
  %547 = vmatpush1.bf16.msra.mxu0 %v506
  %548 = vmatprep.subr.bf16.mxu0 0
  %549 = vmatpush1.bf16.msra.mxu0 %v507
  %550 = vmatprep.subr.bf16.mxu0 0
  %551 = vmatpush1.bf16.msra.mxu0 %v508
  %552 = vmatprep.subr.bf16.mxu0 0
  %553 = vmatpush1.bf16.msra.mxu0 %v509
  %554 = vmatprep.subr.bf16.mxu0 0
  %555 = vmatpush1.bf16.msra.mxu0 %v510
  %556 = vmatprep.subr.bf16.mxu0 0
  %557 = vmatpush1.bf16.msra.mxu0 %v511
  %558 = vmatprep.subr.bf16.mxu0 0
  %559 = vmatpush1.bf16.msra.mxu0 %v512
  %560 = vmatprep.subr.bf16.mxu0 0
  %561 = vmatpush1.bf16.msra.mxu0 %v513
  %562 = vmatprep.mubr.bf16.mxu0 %v394
  %563 = vmatmul.mubr.bf16.gmra.mrb[0].mxu0 %v393
  %v564 = vpop.f32.mrb[0].mxu0
  %v565 = vadd.f32 %v432, %v564
  %v566 = vpop.f32.mrb[0].mxu0
  %v567 = vpop.f32.mrb[0].mxu0
  %v568 = vadd.f32 %v432, %v567
  %v569 = vpop.f32.mrb[0].mxu0
  %570 = vdwg.mxu0
  %v571 = vxor.u32 %v565, 2147483648
  %v572 = vxor.u32 %v568, 2147483648
  %v573 = vmul.f32 %v571, 1.442695
  %v574 = vpow.pop %v573
  %v575 = vmul.f32 %v572, 1.442695
  %v576 = vpow.pop %v575
  %v577 = vadd.f32 %v574, 1.0
  %v578 = vadd.f32 %v576, 1.0
  %v579 = vrcp.pop %v577
  %v580 = vmul.f32 1.0, %v579
  %v581 = vrcp.pop %v578
  %v582 = vmul.f32 1.0, %v581
  %v583 = vpack.c.bf16 %v582, %v580
  %v584 = vld [vmem:[%s5] sm:$0xf]
  %v585 = vld [vmem:[%s5 + $0x4] sm:$0xf]
  %v586 = vld [vmem:[%s5 + $0x8] sm:$0xf]
  %v587 = vld [vmem:[%s5 + $0xc] sm:$0xf]
  %v588 = vld [vmem:[%s5 + $0x10] sm:$0xf]
  %v589 = vld [vmem:[%s5 + $0x14] sm:$0xf]
  %v590 = vld [vmem:[%s5 + $0x18] sm:$0xf]
  %v591 = vld [vmem:[%s5 + $0x1c] sm:$0xf]
  %v592 = vld [vmem:[%s5 + $0x20] sm:$0xf]
  %v593 = vld [vmem:[%s5 + $0x24] sm:$0xf]
  %v594 = vld [vmem:[%s5 + $0x28] sm:$0xf]
  %v595 = vld [vmem:[%s5 + $0x2c] sm:$0xf]
  %v596 = vld [vmem:[%s5 + $0x30] sm:$0xf]
  %v597 = vld [vmem:[%s5 + $0x34] sm:$0xf]
  %v598 = vld [vmem:[%s5 + $0x38] sm:$0xf]
  %v599 = vld [vmem:[%s5 + $0x3c] sm:$0xf]
  %v600 = vld [vmem:[%s6] sm:$0x1]
  %v602 = vlaneseq
  %v603 = vshrl.u32 %v602, 7
  %v604 = vsub.s32 0, %v603
  %v605 = vrot.slane %v600, %v604
  %v623 = vunpack.c.l.b16 %v584
  %v624 = vunpack.c.l.b16 %v585
  %v625 = vunpack.c.l.b16 %v586
  %v626 = vunpack.c.l.b16 %v587
  %v627 = vunpack.c.l.b16 %v588
  %v628 = vunpack.c.l.b16 %v589
  %v629 = vunpack.c.l.b16 %v590
  %v630 = vunpack.c.l.b16 %v591
  %v631 = vunpack.c.l.b16 %v592
  %v632 = vunpack.c.l.b16 %v593
  %v633 = vunpack.c.l.b16 %v594
  %v634 = vunpack.c.l.b16 %v595
  %v635 = vunpack.c.l.b16 %v596
  %v636 = vunpack.c.l.b16 %v597
  %v637 = vunpack.c.l.b16 %v598
  %v638 = vunpack.c.l.b16 %v599
  %v639 = vpack.c.b16 %v624, %v623
  %v640 = vpack.c.b16 %v626, %v625
  %v641 = vpack.c.b16 %v628, %v627
  %v642 = vpack.c.b16 %v630, %v629
  %v643 = vpack.c.b16 %v632, %v631
  %v644 = vpack.c.b16 %v634, %v633
  %v645 = vpack.c.b16 %v636, %v635
  %v646 = vpack.c.b16 %v638, %v637
  %655 = vmatprep.subr.bf16.mxu0 0
  %656 = vmatpush1.bf16.msra.mxu0 %v639
  %657 = vmatprep.subr.bf16.mxu0 0
  %658 = vmatpush1.bf16.msra.mxu0 %v640
  %659 = vmatprep.subr.bf16.mxu0 0
  %660 = vmatpush1.bf16.msra.mxu0 %v641
  %661 = vmatprep.subr.bf16.mxu0 0
  %662 = vmatpush1.bf16.msra.mxu0 %v642
  %663 = vmatprep.subr.bf16.mxu0 0
  %664 = vmatpush1.bf16.msra.mxu0 %v643
  %665 = vmatprep.subr.bf16.mxu0 0
  %666 = vmatpush1.bf16.msra.mxu0 %v644
  %667 = vmatprep.subr.bf16.mxu0 0
  %668 = vmatpush1.bf16.msra.mxu0 %v645
  %669 = vmatprep.subr.bf16.mxu0 0
  %670 = vmatpush1.bf16.msra.mxu0 %v646
  %671 = vmatprep.subr.bf16.mxu0 0
  %672 = vmatpush1.bf16.msra.mxu0 0
  %673 = vmatprep.subr.bf16.mxu0 0
  %674 = vmatpush1.bf16.msra.mxu0 0
  %675 = vmatprep.subr.bf16.mxu0 0
  %676 = vmatpush1.bf16.msra.mxu0 0
  %677 = vmatprep.subr.bf16.mxu0 0
  %678 = vmatpush1.bf16.msra.mxu0 0
  %679 = vmatprep.subr.bf16.mxu0 0
  %680 = vmatpush1.bf16.msra.mxu0 0
  %681 = vmatprep.subr.bf16.mxu0 0
  %682 = vmatpush1.bf16.msra.mxu0 0
  %683 = vmatprep.subr.bf16.mxu0 0
  %684 = vmatpush1.bf16.msra.mxu0 0
  %685 = vmatprep.subr.bf16.mxu0 0
  %686 = vmatpush1.bf16.msra.mxu0 0
  %687 = vmatprep.mubr.bf16.mxu0 0
  %688 = vmatmul.mubr.bf16.gmra.mrb[0].mxu0 %v583
  %v689 = vpop.f32.mrb[0].mxu0
  %v690 = vadd.f32 %v605, %v689
  %v691 = vpop.f32.mrb[0].mxu0
  %v692 = vpop.f32.mrb[0].mxu0
  %v693 = vadd.f32 %v605, %v692
  %v694 = vpop.f32.mrb[0].mxu0
  %695 = vdwg.mxu0
  %v696 = vxor.u32 %v690, 2147483648
  %v697 = vxor.u32 %v693, 2147483648
  %v698 = vmul.f32 %v696, 1.442695
  %v699 = vpow.pop %v698
  %v700 = vmul.f32 %v697, 1.442695
  %v701 = vpow.pop %v700
  %v702 = vadd.f32 %v699, 1.0
  %v703 = vadd.f32 %v701, 1.0
  %v704 = vrcp.pop %v702
  %v705 = vmul.f32 1.0, %v704
  %v706 = vrcp.pop %v703
  %v707 = vmul.f32 1.0, %v706
  %v708 = vpack.c.bf16 %v707, %v705
  %v709 = vld [vmem:[%s7] sm:$0xf]
  %v710 = vld [vmem:[%s7 + $0x4] sm:$0xf]
  %v711 = vld [vmem:[%s7 + $0x8] sm:$0xf]
  %v712 = vld [vmem:[%s7 + $0xc] sm:$0xf]
  %v713 = vld [vmem:[%s7 + $0x10] sm:$0xf]
  %v714 = vld [vmem:[%s7 + $0x14] sm:$0xf]
  %v715 = vld [vmem:[%s7 + $0x18] sm:$0xf]
  %v716 = vld [vmem:[%s7 + $0x1c] sm:$0xf]
  %v717 = vld [vmem:[%s7 + $0x20] sm:$0xf]
  %v718 = vld [vmem:[%s7 + $0x24] sm:$0xf]
  %v719 = vld [vmem:[%s7 + $0x28] sm:$0xf]
  %v720 = vld [vmem:[%s7 + $0x2c] sm:$0xf]
  %v721 = vld [vmem:[%s7 + $0x30] sm:$0xf]
  %v722 = vld [vmem:[%s7 + $0x34] sm:$0xf]
  %v723 = vld [vmem:[%s7 + $0x38] sm:$0xf]
  %v724 = vld [vmem:[%s7 + $0x3c] sm:$0xf]
  %v725 = vld [vmem:[%s8] sm:$0x1]
  %v727 = vlaneseq
  %v728 = vshrl.u32 %v727, 7
  %v729 = vsub.s32 0, %v728
  %v730 = vrot.slane %v725, %v729
  %v748 = vunpack.c.l.b16 %v709
  %v749 = vunpack.c.l.b16 %v710
  %v750 = vunpack.c.l.b16 %v711
  %v751 = vunpack.c.l.b16 %v712
  %v752 = vunpack.c.l.b16 %v713
  %v753 = vunpack.c.l.b16 %v714
  %v754 = vunpack.c.l.b16 %v715
  %v755 = vunpack.c.l.b16 %v716
  %v756 = vunpack.c.l.b16 %v717
  %v757 = vunpack.c.l.b16 %v718
  %v758 = vunpack.c.l.b16 %v719
  %v759 = vunpack.c.l.b16 %v720
  %v760 = vunpack.c.l.b16 %v721
  %v761 = vunpack.c.l.b16 %v722
  %v762 = vunpack.c.l.b16 %v723
  %v763 = vunpack.c.l.b16 %v724
  %v764 = vpack.c.b16 %v749, %v748
  %v765 = vpack.c.b16 %v751, %v750
  %v766 = vpack.c.b16 %v753, %v752
  %v767 = vpack.c.b16 %v755, %v754
  %v768 = vpack.c.b16 %v757, %v756
  %v769 = vpack.c.b16 %v759, %v758
  %v770 = vpack.c.b16 %v761, %v760
  %v771 = vpack.c.b16 %v763, %v762
  %780 = vmatprep.subr.bf16.mxu0 0
  %781 = vmatpush1.bf16.msra.mxu0 %v764
  %782 = vmatprep.subr.bf16.mxu0 0
  %783 = vmatpush1.bf16.msra.mxu0 %v765
  %784 = vmatprep.subr.bf16.mxu0 0
  %785 = vmatpush1.bf16.msra.mxu0 %v766
  %786 = vmatprep.subr.bf16.mxu0 0
  %787 = vmatpush1.bf16.msra.mxu0 %v767
  %788 = vmatprep.subr.bf16.mxu0 0
  %789 = vmatpush1.bf16.msra.mxu0 %v768
  %790 = vmatprep.subr.bf16.mxu0 0
  %791 = vmatpush1.bf16.msra.mxu0 %v769
  %792 = vmatprep.subr.bf16.mxu0 0
  %793 = vmatpush1.bf16.msra.mxu0 %v770
  %794 = vmatprep.subr.bf16.mxu0 0
  %795 = vmatpush1.bf16.msra.mxu0 %v771
  %796 = vmatprep.subr.bf16.mxu0 0
  %797 = vmatpush1.bf16.msra.mxu0 0
  %798 = vmatprep.subr.bf16.mxu0 0
  %799 = vmatpush1.bf16.msra.mxu0 0
  %800 = vmatprep.subr.bf16.mxu0 0
  %801 = vmatpush1.bf16.msra.mxu0 0
  %802 = vmatprep.subr.bf16.mxu0 0
  %803 = vmatpush1.bf16.msra.mxu0 0
  %804 = vmatprep.subr.bf16.mxu0 0
  %805 = vmatpush1.bf16.msra.mxu0 0
  %806 = vmatprep.subr.bf16.mxu0 0
  %807 = vmatpush1.bf16.msra.mxu0 0
  %808 = vmatprep.subr.bf16.mxu0 0
  %809 = vmatpush1.bf16.msra.mxu0 0
  %810 = vmatprep.subr.bf16.mxu0 0
  %811 = vmatpush1.bf16.msra.mxu0 0
  %812 = vmatprep.mubr.bf16.mxu0 0
  %813 = vmatmul.mubr.bf16.gmra.mrb[0].mxu0 %v708
  %v814 = vpop.f32.mrb[0].mxu0
  %v815 = vadd.f32 %v730, %v814
  %v816 = vpop.f32.mrb[0].mxu0
  %v817 = vpop.f32.mrb[0].mxu0
  %v818 = vadd.f32 %v730, %v817
  %v819 = vpop.f32.mrb[0].mxu0
  %820 = vdwg.mxu0
  %v821 = vxor.u32 %v815, 2147483648
  %v822 = vxor.u32 %v818, 2147483648
  %v823 = vmul.f32 %v821, 1.442695
  %v824 = vpow.pop %v823
  %v825 = vmul.f32 %v822, 1.442695
  %v826 = vpow.pop %v825
  %v827 = vadd.f32 %v824, 1.0
  %v828 = vadd.f32 %v826, 1.0
  %v829 = vrcp.pop %v827
  %v830 = vmul.f32 1.0, %v829
  %v831 = vrcp.pop %v828
  %v832 = vmul.f32 1.0, %v831
  %v833 = vpack.c.bf16 %v832, %v830
  %v834 = vld [vmem:[%s9] sm:$0xf]
  %v835 = vld [vmem:[%s9 + $0x4] sm:$0xf]
  %v836 = vld [vmem:[%s9 + $0x8] sm:$0xf]
  %v837 = vld [vmem:[%s9 + $0xc] sm:$0xf]
  %v838 = vld [vmem:[%s9 + $0x10] sm:$0xf]
  %v839 = vld [vmem:[%s9 + $0x14] sm:$0xf]
  %v840 = vld [vmem:[%s9 + $0x18] sm:$0xf]
  %v841 = vld [vmem:[%s9 + $0x1c] sm:$0xf]
  %v842 = vld [vmem:[%s9 + $0x20] sm:$0xf]
  %v843 = vld [vmem:[%s9 + $0x24] sm:$0xf]
  %v844 = vld [vmem:[%s9 + $0x28] sm:$0xf]
  %v845 = vld [vmem:[%s9 + $0x2c] sm:$0xf]
  %v846 = vld [vmem:[%s9 + $0x30] sm:$0xf]
  %v847 = vld [vmem:[%s9 + $0x34] sm:$0xf]
  %v848 = vld [vmem:[%s9 + $0x38] sm:$0xf]
  %v849 = vld [vmem:[%s9 + $0x3c] sm:$0xf]
  %v850 = vld [vmem:[%s10] sm:$0x1]
  %v852 = vlaneseq
  %v853 = vshrl.u32 %v852, 7
  %v854 = vsub.s32 0, %v853
  %v855 = vrot.slane %v850, %v854
  %v873 = vunpack.c.l.b16 %v834
  %v874 = vunpack.c.l.b16 %v835
  %v875 = vunpack.c.l.b16 %v836
  %v876 = vunpack.c.l.b16 %v837
  %v877 = vunpack.c.l.b16 %v838
  %v878 = vunpack.c.l.b16 %v839
  %v879 = vunpack.c.l.b16 %v840
  %v880 = vunpack.c.l.b16 %v841
  %v881 = vunpack.c.l.b16 %v842
  %v882 = vunpack.c.l.b16 %v843
  %v883 = vunpack.c.l.b16 %v844
  %v884 = vunpack.c.l.b16 %v845
  %v885 = vunpack.c.l.b16 %v846
  %v886 = vunpack.c.l.b16 %v847
  %v887 = vunpack.c.l.b16 %v848
  %v888 = vunpack.c.l.b16 %v849
  %v889 = vpack.c.b16 %v874, %v873
  %v890 = vpack.c.b16 %v876, %v875
  %v891 = vpack.c.b16 %v878, %v877
  %v892 = vpack.c.b16 %v880, %v879
  %v893 = vpack.c.b16 %v882, %v881
  %v894 = vpack.c.b16 %v884, %v883
  %v895 = vpack.c.b16 %v886, %v885
  %v896 = vpack.c.b16 %v888, %v887
  %905 = vmatprep.subr.bf16.mxu0 0
  %906 = vmatpush1.bf16.msra.mxu0 %v889
  %907 = vmatprep.subr.bf16.mxu0 0
  %908 = vmatpush1.bf16.msra.mxu0 %v890
  %909 = vmatprep.subr.bf16.mxu0 0
  %910 = vmatpush1.bf16.msra.mxu0 %v891
  %911 = vmatprep.subr.bf16.mxu0 0
  %912 = vmatpush1.bf16.msra.mxu0 %v892
  %913 = vmatprep.subr.bf16.mxu0 0
  %914 = vmatpush1.bf16.msra.mxu0 %v893
  %915 = vmatprep.subr.bf16.mxu0 0
  %916 = vmatpush1.bf16.msra.mxu0 %v894
  %917 = vmatprep.subr.bf16.mxu0 0
  %918 = vmatpush1.bf16.msra.mxu0 %v895
  %919 = vmatprep.subr.bf16.mxu0 0
  %920 = vmatpush1.bf16.msra.mxu0 %v896
  %921 = vmatprep.subr.bf16.mxu0 0
  %922 = vmatpush1.bf16.msra.mxu0 0
  %923 = vmatprep.subr.bf16.mxu0 0
  %924 = vmatpush1.bf16.msra.mxu0 0
  %925 = vmatprep.subr.bf16.mxu0 0
  %926 = vmatpush1.bf16.msra.mxu0 0
  %927 = vmatprep.subr.bf16.mxu0 0
  %928 = vmatpush1.bf16.msra.mxu0 0
  %929 = vmatprep.subr.bf16.mxu0 0
  %930 = vmatpush1.bf16.msra.mxu0 0
  %931 = vmatprep.subr.bf16.mxu0 0
  %932 = vmatpush1.bf16.msra.mxu0 0
  %933 = vmatprep.subr.bf16.mxu0 0
  %934 = vmatpush1.bf16.msra.mxu0 0
  %935 = vmatprep.subr.bf16.mxu0 0
  %936 = vmatpush1.bf16.msra.mxu0 0
  %937 = vmatprep.mubr.bf16.mxu0 0
  %938 = vmatmul.mubr.bf16.gmra.mrb[0].mxu0 %v833
  %v939 = vpop.f32.mrb[0].mxu0
  %v940 = vadd.f32 %v855, %v939
  %v941 = vpop.f32.mrb[0].mxu0
  %v942 = vpop.f32.mrb[0].mxu0
  %v943 = vadd.f32 %v855, %v942
  %v944 = vpop.f32.mrb[0].mxu0
  %945 = vdwg.mxu0
  %v946 = vxor.u32 %v940, 2147483648
  %v947 = vxor.u32 %v943, 2147483648
  %v948 = vmul.f32 %v946, 1.442695
  %v949 = vpow.pop %v948
  %v950 = vmul.f32 %v947, 1.442695
  %v951 = vpow.pop %v950
  %v952 = vadd.f32 %v949, 1.0
  %v953 = vadd.f32 %v951, 1.0
  %v954 = vrcp.pop %v952
  %v955 = vmul.f32 1.0, %v954
  %v956 = vrcp.pop %v953
  %v957 = vmul.f32 1.0, %v956
  %v958 = vpack.c.bf16 %v957, %v955
  %v959 = vld [vmem:[%s11] sm:$0xf]
  %v960 = vld [vmem:[%s11 + $0x4] sm:$0xf]
  %v961 = vld [vmem:[%s11 + $0x8] sm:$0xf]
  %v962 = vld [vmem:[%s11 + $0xc] sm:$0xf]
  %v963 = vld [vmem:[%s11 + $0x10] sm:$0xf]
  %v964 = vld [vmem:[%s11 + $0x14] sm:$0xf]
  %v965 = vld [vmem:[%s11 + $0x18] sm:$0xf]
  %v966 = vld [vmem:[%s11 + $0x1c] sm:$0xf]
  %v967 = vld [vmem:[%s11 + $0x20] sm:$0xf]
  %v968 = vld [vmem:[%s11 + $0x24] sm:$0xf]
  %v969 = vld [vmem:[%s11 + $0x28] sm:$0xf]
  %v970 = vld [vmem:[%s11 + $0x2c] sm:$0xf]
  %v971 = vld [vmem:[%s11 + $0x30] sm:$0xf]
  %v972 = vld [vmem:[%s11 + $0x34] sm:$0xf]
  %v973 = vld [vmem:[%s11 + $0x38] sm:$0xf]
  %v974 = vld [vmem:[%s11 + $0x3c] sm:$0xf]
  %v975 = vld [vmem:[#allocation2] sm:$0x1]
  %v977 = vlaneseq
  %v978 = vshrl.u32 %v977, 7
  %v979 = vsub.s32 0, %v978
  %v980 = vrot.slane %v975, %v979
  %v998 = vunpack.c.l.b16 %v959
  %v999 = vunpack.c.l.b16 %v960
  %v1000 = vunpack.c.l.b16 %v961
  %v1001 = vunpack.c.l.b16 %v962
  %v1002 = vunpack.c.l.b16 %v963
  %v1003 = vunpack.c.l.b16 %v964
  %v1004 = vunpack.c.l.b16 %v965
  %v1005 = vunpack.c.l.b16 %v966
  %v1006 = vunpack.c.l.b16 %v967
  %v1007 = vunpack.c.l.b16 %v968
  %v1008 = vunpack.c.l.b16 %v969
  %v1009 = vunpack.c.l.b16 %v970
  %v1010 = vunpack.c.l.b16 %v971
  %v1011 = vunpack.c.l.b16 %v972
  %v1012 = vunpack.c.l.b16 %v973
  %v1013 = vunpack.c.l.b16 %v974
  %v1014 = vpack.c.b16 %v999, %v998
  %v1015 = vpack.c.b16 %v1001, %v1000
  %v1016 = vpack.c.b16 %v1003, %v1002
  %v1017 = vpack.c.b16 %v1005, %v1004
  %v1018 = vpack.c.b16 %v1007, %v1006
  %v1019 = vpack.c.b16 %v1009, %v1008
  %v1020 = vpack.c.b16 %v1011, %v1010
  %v1021 = vpack.c.b16 %v1013, %v1012
  %1030 = vmatprep.subr.bf16.mxu0 0
  %1031 = vmatpush1.bf16.msra.mxu0 %v1014
  %1032 = vmatprep.subr.bf16.mxu0 0
  %1033 = vmatpush1.bf16.msra.mxu0 %v1015
  %1034 = vmatprep.subr.bf16.mxu0 0
  %1035 = vmatpush1.bf16.msra.mxu0 %v1016
  %1036 = vmatprep.subr.bf16.mxu0 0
  %1037 = vmatpush1.bf16.msra.mxu0 %v1017
  %1038 = vmatprep.subr.bf16.mxu0 0
  %1039 = vmatpush1.bf16.msra.mxu0 %v1018
  %1040 = vmatprep.subr.bf16.mxu0 0
  %1041 = vmatpush1.bf16.msra.mxu0 %v1019
  %1042 = vmatprep.subr.bf16.mxu0 0
  %1043 = vmatpush1.bf16.msra.mxu0 %v1020
  %1044 = vmatprep.subr.bf16.mxu0 0
  %1045 = vmatpush1.bf16.msra.mxu0 %v1021
  %1046 = vmatprep.subr.bf16.mxu0 0
  %1047 = vmatpush1.bf16.msra.mxu0 0
  %1048 = vmatprep.subr.bf16.mxu0 0
  %1049 = vmatpush1.bf16.msra.mxu0 0
  %1050 = vmatprep.subr.bf16.mxu0 0
  %1051 = vmatpush1.bf16.msra.mxu0 0
  %1052 = vmatprep.subr.bf16.mxu0 0
  %1053 = vmatpush1.bf16.msra.mxu0 0
  %1054 = vmatprep.subr.bf16.mxu0 0
  %1055 = vmatpush1.bf16.msra.mxu0 0
  %1056 = vmatprep.subr.bf16.mxu0 0
  %1057 = vmatpush1.bf16.msra.mxu0 0
  %1058 = vmatprep.subr.bf16.mxu0 0
  %1059 = vmatpush1.bf16.msra.mxu0 0
  %1060 = vmatprep.subr.bf16.mxu0 0
  %1061 = vmatpush1.bf16.msra.mxu0 0
  %1062 = vmatprep.mubr.bf16.mxu0 0
  %1063 = vmatmul.mubr.bf16.gmra.mrb[0].mxu0 %v958
  %v1064 = vpop.f32.mrb[0].mxu0
  %v1065 = vadd.f32 %v980, %v1064
  %v1066 = vpop.f32.mrb[0].mxu0
  %v1067 = vpop.f32.mrb[0].mxu0
  %v1068 = vadd.f32 %v980, %v1067
  %v1069 = vpop.f32.mrb[0].mxu0
  %1070 = vdwg.mxu0
  %v1071 = vmax.f32 %v1065, 0.0
  %v1072 = vmax.f32 %v1068, 0.0
  %vm1073 = vcmask 7168
  %1074 = vst.msk [vmem:[%s13] sm:$0xff] %vm1073, %v1071
  %1075 = vst.msk [vmem:[%s13 + $0x8] sm:$0xff] %vm1073, %v1072
  // Predicated region
  $region54: #{mlp_forward.1} parent=0 // pred_check
    _
  $region55: #{mlp_forward.1} parent=0 // pred_check_branch
    %1077 = sbr.rel (0) target = $region57
  $region56: #{mlp_forward.1} parent=0 // pred_region
    _
  $region57: #{mlp_forward.1} parent=0 // pred_fallthru
    _
  // Predicated region
  $region58: #{mlp_forward.1} parent=0 // pred_check
    _
  $region59: #{mlp_forward.1} parent=0 // pred_check_branch
    %1079 = sbr.rel (0) target = $region61
  $region60: #{mlp_forward.1} parent=0 // pred_region
    _
  $region61: #{mlp_forward.1} parent=0 // pred_fallthru
    _

</llo_original>
